<compile_context>
chip_gen: v7x
topology: tpu7x:2x2x1
jax: 0.10.0
libtpu: 0.0.40
codegen_flags: <defaults>
</compile_context>

<pallas_src>
import functools

import jax
import jax.numpy as jnp
from jax.experimental import pallas as pl
from jax.experimental.pallas import tpu as pltpu

_INV3 = 1.0 / 3.0
_INV_LN10 = 1.0 / 2.302585092994046  # 1 / ln(10); multiply instead of divide


def _neg_log10_one_minus_cbrt(norm):
    """-log10(1 - norm**(1/3)) for norm >= 0, with a guarded cube root (EUP)."""
    cbrt = jnp.exp(jnp.log(jnp.maximum(norm, 1e-30)) * _INV3)
    cbrt = jnp.where(norm > 0.0, cbrt, 0.0)
    # NOTE: if cbrt >= 1 this is NaN/inf, exactly like the PyTorch reference.
    return jnp.log(1.0 - cbrt) * (-_INV_LN10)


# ----------------------------------------------------------------------------
# Kernels
# ----------------------------------------------------------------------------
def _closs_small_kernel(pred_ref, tgt_ref, loss_ref):
    """Single-block fast path: whole (N, D) arrays resident in VMEM."""
    diff = pred_ref[...].astype(jnp.float32) - tgt_ref[...].astype(jnp.float32)
    norm = jnp.sum(diff * diff, axis=0, keepdims=True)          # (1, D)
    loss_ref[0, 0] = jnp.sum(_neg_log10_one_minus_cbrt(norm))   # scalar


def _closs_tiled_kernel(pred_ref, tgt_ref, val_ref, acc_ref, *,
                        n_rows, n_cols, tile_n, tile_d, mask_rows, mask_cols):
    """Tiled path. grid = (D tiles [parallel], N tiles [arbitrary, reduction])."""
    j = pl.program_id(0)          # D tile (parallel)
    k = pl.program_id(1)          # N tile (reduction; last grid axis)

    @pl.when(k == 0)
    def _():
        acc_ref[...] = jnp.zeros_like(acc_ref)

    n_groups = tile_n // 8
    row_base = k * tile_n
    if mask_rows:
        iota8 = jax.lax.broadcasted_iota(jnp.int32, (8, 1), 0)   # hoisted

    # Hot loop: per 8-row group, read directly from the VMEM tiles, upcast,
    # sub, square, accumulate (pure VPU).  No full-tile temporaries; next
    # tiles' DMAs are hidden by BlockSpec double-buffering.
    def body(g, carry):
        r = pl.multiple_of(g * 8, 8)
        p = pred_ref[pl.ds(r, 8), :].astype(jnp.float32)
        t = tgt_ref[pl.ds(r, 8), :].astype(jnp.float32)
        diff = p - t
        sq = diff * diff
        if mask_rows:
            rows = row_base + r + iota8                     # (8, 1) global rows
            sq = jnp.where(rows < n_rows, sq, 0.0)          # zero the N tail
        acc_ref[...] += sq                                  # (8, tile_d)
        return carry

    jax.lax.fori_loop(0, n_groups, body, 0, unroll=8)

    @pl.when(k == pl.num_programs(1) - 1)
    def _():
        # Finalize once per D tile: sublane reduce (XLU) + transcendentals
        # (EUP) on a single (1, tile_d) strip, lane-dense output.
        norm = jnp.sum(acc_ref[...], axis=0, keepdims=True)      # (1, tile_d)
        val = _neg_log10_one_minus_cbrt(norm)
        if mask_cols:
            cols = j * tile_d + jax.lax.broadcasted_iota(
                jnp.int32, (1, tile_d), 1)
            val = jnp.where(cols < n_cols, val, 0.0)             # zero D tail
        val_ref[...] = val


# ----------------------------------------------------------------------------
# Wrapper helpers
# ----------------------------------------------------------------------------
def _round_up(x, m):
    return (x + m - 1) // m * m


def _cdiv(a, b):
    return (a + b - 1) // b


def _vmem_capacity_bytes():
    try:
        return int(pltpu.get_tpu_info().vmem_capacity_bytes)
    except Exception:
        return 64 * 1024 * 1024   # conservative fallback (v7x-sized)


def _num_tensorcores():
    try:
        info = pltpu.get_tpu_info()
        for name in ("num_cores", "tensorcore_count", "num_tensorcores",
                     "tensorcores_per_chip", "cores_per_chip"):
            v = getattr(info, name, None)
            if v:
                return int(v)
    except Exception:
        pass
    try:
        v = getattr(jax.devices()[0], "num_cores", None)
        if v:
            return int(v)
    except Exception:
        pass
    return 1


def _choose_tiles(n, d, itemsize, num_cores, tile_budget_bytes,
                  tile_n=None, tile_d=None):
    packing = max(1, 4 // itemsize)
    sub = 8 * packing                      # native sublane packing for tile_n
    d128 = _round_up(d, 128)
    n_sub = _round_up(n, sub)

    if tile_d is None:
        if num_cores >= 2 and d128 >= 2 * 128:
            # >=2 parallel D tiles so megacore (v7x) shards both TensorCores.
            tile_d = _round_up(_cdiv(d128, num_cores), 128)
        else:
            # Full width -> each block is one contiguous HBM transfer.
            tile_d = d128
        if sub * tile_d * itemsize > tile_budget_bytes:
            tile_d = max(128,
                         (tile_budget_bytes // (sub * itemsize)) // 128 * 128)
    else:
        tile_d = min(_round_up(tile_d, 128), d128)

    if tile_n is None:
        tile_n = (tile_budget_bytes // (tile_d * itemsize)) // sub * sub
        tile_n = max(sub, tile_n)
    else:
        tile_n = _round_up(tile_n, sub)
    tile_n = min(tile_n, n_sub)
    return tile_n, tile_d


# ----------------------------------------------------------------------------
# Wrapper
# ----------------------------------------------------------------------------
def closs(output, target, *, tile_n=None, tile_d=None, num_cores=None,
          min_tiled_bytes=6 * 1024 * 1024, use_grid=None):
    """Pallas implementation of CLoss.forward. Returns a scalar float32."""
    assert output.shape == target.shape and output.ndim == 2
    n, d = output.shape
    itemsize = jnp.dtype(output.dtype).itemsize

    cost = pl.CostEstimate(
        flops=3 * n * d,                       # sub + mul + accumulate
        transcendentals=3 * d,                 # log, exp, log per column
        bytes_accessed=2 * n * d * itemsize + 4 * d,
    )

    if use_grid is None:
        # Gate on f32-equivalent bytes so in-kernel temporaries are accounted.
        use_grid = n * d * 4 > min_tiled_bytes

    if not use_grid:
        # Tiny-input fast path: no grid, both arrays mapped whole into VMEM.
        out = pl.pallas_call(
            _closs_small_kernel,
            out_shape=jax.ShapeDtypeStruct((1, 1), jnp.float32),
            in_specs=[
                pl.BlockSpec(memory_space=pltpu.MemorySpace.VMEM),
                pl.BlockSpec(memory_space=pltpu.MemorySpace.VMEM),
            ],
            out_specs=pl.BlockSpec(memory_space=pltpu.MemorySpace.SMEM),
            compiler_params=pltpu.CompilerParams(
                vmem_limit_bytes=40 * 1024 * 1024),
            cost_estimate=cost,
        )(output, target)
        return out[0, 0]

    # ---------------- Tiled, pipelined path (no wrapper padding) ----------------
    vmem_cap = _vmem_capacity_bytes()
    tile_budget = (8 * 1024 * 1024 if vmem_cap >= 128 * 1024 * 1024
                   else 4 * 1024 * 1024)
    if num_cores is None:
        num_cores = _num_tensorcores()

    tile_n, tile_d = _choose_tiles(n, d, itemsize, num_cores, tile_budget,
                                   tile_n=tile_n, tile_d=tile_d)

    grid = (_cdiv(d, tile_d), _cdiv(n, tile_n))   # (parallel D, arbitrary N)

    # VMEM budget: 2 inputs x 2 pipeline buffers x tile, plus accumulator,
    # output strip and slack; clamped below the physical capacity.
    tile_bytes = tile_n * tile_d * itemsize
    needed = 4 * tile_bytes + 16 * tile_d * 4 + (2 << 20)
    vmem_limit = int(min(vmem_cap - (16 << 20),
                         max(32 << 20, needed + (8 << 20))))

    kernel = functools.partial(
        _closs_tiled_kernel,
        n_rows=n, n_cols=d, tile_n=tile_n, tile_d=tile_d,
        mask_rows=(n % tile_n) != 0, mask_cols=(d % tile_d) != 0,
    )

    vals = pl.pallas_call(
        kernel,
        out_shape=jax.ShapeDtypeStruct((1, d), jnp.float32),
        grid=grid,
        in_specs=[
            pl.BlockSpec((tile_n, tile_d), lambda jj, kk: (kk, jj)),
            pl.BlockSpec((tile_n, tile_d), lambda jj, kk: (kk, jj)),
        ],
        out_specs=pl.BlockSpec((1, tile_d), lambda jj, kk: (0, jj)),
        scratch_shapes=[pltpu.VMEM((8, tile_d), jnp.float32)],
        compiler_params=pltpu.CompilerParams(
            dimension_semantics=("parallel", "arbitrary"),
            vmem_limit_bytes=vmem_limit,
        ),
        cost_estimate=cost,
    )(output, target)

    # Tiny (d,) cross-column reduction done outside the kernel; the output has
    # exactly d columns (no padding), so no wrapper-side masking needed.
    return jnp.sum(vals)


# ----------------------------------------------------------------------------
# Reference + self-test
# ----------------------------------------------------------------------------
def closs_ref(output, target):
    diff = output.astype(jnp.float32) - target.astype(jnp.float32)
    norm = jnp.sum(diff * diff, axis=0)
    norm = norm ** (1.0 / 3.0)
    return jnp.sum(-jnp.log10(1.0 - norm))


if __name__ == "__main__":
    key = jax.random.PRNGKey(0)
    ks = jax.random.split(key, 8)

    # 1) Tiny input -> gridless single-block fast path.
    o1 = 0.01 * jax.random.normal(ks[0], (8, 128), dtype=jnp.float32)
    t1 = 0.01 * jax.random.normal(ks[1], (8, 128), dtype=jnp.float32)
    l1 = closs(o1, t1)

    # 2) Ragged f32 -> tiled path, forced small tiles, in-kernel row+col masks,
    #    multi-tile reduction on N and multiple D tiles (grid = (3, 4)).
    o2 = 0.004 * jax.random.normal(ks[2], (500, 600), dtype=jnp.float32)
    t2 = 0.004 * jax.random.normal(ks[3], (500, 600), dtype=jnp.float32)
    l2 = closs(o2, t2, tile_n=128, tile_d=256, use_grid=True)

    # 3) Ragged bf16 -> tiled path, packed (16,128)-aligned tile_n, forced
    #    2-way D split (megacore-style), in-kernel upcast, no wrapper padding.
    o3 = (0.004 * jax.random.normal(ks[4], (1000, 900), dtype=jnp.float32)
          ).astype(jnp.bfloat16)
    t3 = (0.004 * jax.random.normal(ks[5], (1000, 900), dtype=jnp.float32)
          ).astype(jnp.bfloat16)
    l3 = closs(o3, t3, tile_n=256, num_cores=2, use_grid=True)

    # 4) Auto-tiled f32 (generation-aware tile/VMEM selection, full-width or
    #    split D depending on detected core count).
    o4 = 0.002 * jax.random.normal(ks[6], (2048, 1536), dtype=jnp.float32)
    t4 = 0.002 * jax.random.normal(ks[7], (2048, 1536), dtype=jnp.float32)
    l4 = closs(o4, t4)

    jax.block_until_ready((l1, l2, l3, l4))

    r1, r2, r3, r4 = (closs_ref(o1, t1), closs_ref(o2, t2),
                      closs_ref(o3, t3), closs_ref(o4, t4))
    assert jnp.allclose(l1, r1, rtol=1e-4, atol=1e-4), (l1, r1)
    assert jnp.allclose(l2, r2, rtol=1e-4, atol=1e-3), (l2, r2)
    assert jnp.allclose(l3, r3, rtol=1e-3, atol=1e-3), (l3, r3)
    assert jnp.allclose(l4, r4, rtol=2e-4, atol=1e-3), (l4, r4)
    print("KERNEL_OK")
</pallas_src>

<mosaic_0001>
module attributes {stable_mosaic.version = 11 : i64} {
  func.func @_closs_small_kernel(%arg0: memref<8x128xf32, #tpu.memory_space<vmem>>, %arg1: memref<8x128xf32, #tpu.memory_space<vmem>>, %arg2: memref<1x1xf32, #tpu.memory_space<smem>>) attributes {dimension_semantics = [], scalar_prefetch = 0 : i64, scratch_operands = 0 : i64, tpu.core_type = #tpu.core_type<tc>} {
    %c0 = arith.constant 0 : index
    %c0_0 = arith.constant 0 : index
    %0 = vector.load %arg0[%c0, %c0_0] : memref<8x128xf32, #tpu.memory_space<vmem>>, vector<8x128xf32>
    %c0_1 = arith.constant 0 : index
    %c0_2 = arith.constant 0 : index
    %1 = vector.load %arg1[%c0_1, %c0_2] : memref<8x128xf32, #tpu.memory_space<vmem>>, vector<8x128xf32>
    %2 = arith.subf %0, %1 : vector<8x128xf32>
    %3 = arith.mulf %2, %2 : vector<8x128xf32>
    %cst = arith.constant dense<0.000000e+00> : vector<128xf32>
    %4 = vector.multi_reduction <add>, %3, %cst [0] : vector<8x128xf32> to vector<128xf32>
    %5 = vector.shape_cast %4 : vector<128xf32> to vector<1x128xf32>
    %cst_3 = arith.constant 1.000000e-30 : f32
    %6 = vector.broadcast %cst_3 : f32 to vector<1x128xf32>
    %7 = arith.maximumf %5, %6 : vector<1x128xf32>
    %8 = math.log %7 : vector<1x128xf32>
    %cst_4 = arith.constant 0.333333343 : f32
    %9 = vector.broadcast %cst_4 : f32 to vector<1x128xf32>
    %10 = arith.mulf %8, %9 : vector<1x128xf32>
    %11 = math.exp %10 : vector<1x128xf32>
    %cst_5 = arith.constant 0.000000e+00 : f32
    %12 = vector.broadcast %cst_5 : f32 to vector<1x128xf32>
    %13 = arith.cmpf ogt, %5, %12 : vector<1x128xf32>
    %cst_6 = arith.constant 0.000000e+00 : f32
    %14 = vector.broadcast %cst_6 : f32 to vector<1x128xf32>
    %15 = arith.select %13, %11, %14 : vector<1x128xi1>, vector<1x128xf32>
    %cst_7 = arith.constant 1.000000e+00 : f32
    %16 = vector.broadcast %cst_7 : f32 to vector<1x128xf32>
    %17 = arith.subf %16, %15 : vector<1x128xf32>
    %18 = math.log %17 : vector<1x128xf32>
    %cst_8 = arith.constant -0.434294492 : f32
    %19 = vector.broadcast %cst_8 : f32 to vector<1x128xf32>
    %20 = arith.mulf %18, %19 : vector<1x128xf32>
    %21 = vector.shape_cast %20 : vector<1x128xf32> to vector<1x1x128xf32>
    %cst_9 = arith.constant dense<0.000000e+00> : vector<1xf32>
    %22 = vector.multi_reduction <add>, %21, %cst_9 [1, 2] : vector<1x1x128xf32> to vector<1xf32>
    %23 = vector.shape_cast %22 : vector<1xf32> to vector<1x1x1xf32>
    %24 = vector.extract %23[0, 0, 0] : f32 from vector<1x1x1xf32>
    %c0_10 = arith.constant 0 : index
    %c0_11 = arith.constant 0 : index
    %25 = memref.load %arg2[%c0_10, %c0_11] : memref<1x1xf32, #tpu.memory_space<smem>>
    memref.store %24, %arg2[%c0_10, %c0_11] : memref<1x1xf32, #tpu.memory_space<smem>>
    return
  }
}

</mosaic_0001>

<llo_original>
// kernel: tpu_custom_call.1
$region0: #{tpu_custom_call.1}
  #allocation0 [shape = 'u32[]', space=smem, size = 0x4, offset = 0x4, fixed_abs, tag = 'smem constant byte address 0x4 - core index']
  #allocation1 [shape = 'u32[144,128]{1,0:T(1,128)}', space=vmem, size = 0x12000, scoped, tag = 'internal scratch']
  %s0 = inlined_call_operand.hbm [shape: f32[8,128], index: 0, kind: input, shape index: {}]
  %s1 = inlined_call_operand.hbm [shape: f32[8,128], index: 1, kind: input, shape index: {}]
  %s2 = inlined_call_operand.hbm [shape: f32[1,1], index: 2, kind: output, shape index: {}]
  %s3 = sld [smem:[#allocation0]]
  $region26: #{tpu_custom_call.1} parent=0
    _
  %s5 = ssub.s32 1, %s3
  %s6 = scalar_select 0, %s5, %s3
  $region1: #{tpu_custom_call.1} parent=0
    #allocation2 [shape = 'u8[4096]{0}', space=vmem, size = 0x1000, scoped, tag = 'input window, operand 0, single buffered']
    #allocation3 [shape = 's32[1]{0}', space=sflag, size = 0x4, scoped, tag = 'scoped memory for tpu_custom_call.1']
    #allocation4 [shape = 's32[1]{0}', space=sflag, size = 0x4, scoped, tag = 'scoped memory for tpu_custom_call.1']
    #allocation5 [shape = 'u8[4096]{0}', space=vmem, size = 0x1000, scoped, tag = 'input window, operand 1, single buffered']
    #allocation6 [shape = 's32[1]{0}', space=sflag, size = 0x4, scoped, tag = 'scoped memory for tpu_custom_call.1']
    #allocation7 [shape = 'u8[512]{0}', space=smem, size = 0x200, scoped, tag = 'output window, operand 0, single buffered']
    %7 = vsyncpa [#allocation3], 0
    %8 = vsyncpa [#allocation6], 0
    %9 = vsyncpa [#allocation4], 0
    // Predicated region
    $region2: #{tpu_custom_call.1} parent=1 // pred_check
      _
    $region3: #{tpu_custom_call.1} parent=1 // pred_check_branch
      %11 = sbr.rel (0) target = $region5
    $region4: #{tpu_custom_call.1} parent=1 // pred_region
      %s13 = ssub.s32 128, 128
      %14 = vsyncadd [#allocation3], %s13
      %s16 = sshll.u32 [#allocation2], 4
      %s17 = int_to_ptr.vmem [resolvable:$true] %s16
      %19 = dma.hbm_to_vmem [thread:$0]  %s0, 128, %s17, [#allocation3]
    $region5: #{tpu_custom_call.1} parent=1 // pred_fallthru
      _
    // Predicated region
    $region6: #{tpu_custom_call.1} parent=1 // pred_check
      _
    $region7: #{tpu_custom_call.1} parent=1 // pred_check_branch
      %21 = sbr.rel (0) target = $region9
    $region8: #{tpu_custom_call.1} parent=1 // pred_region
      %s23 = ssub.s32 128, 128
      %24 = vsyncadd [#allocation6], %s23
      %s26 = sshll.u32 [#allocation5], 4
      %s27 = int_to_ptr.vmem [resolvable:$true] %s26
      %29 = dma.hbm_to_vmem [thread:$0]  %s1, 128, %s27, [#allocation6]
    $region9: #{tpu_custom_call.1} parent=1 // pred_fallthru
      _
    // Predicated region
    $region10: #{tpu_custom_call.1} parent=1 // pred_check
      _
    $region11: #{tpu_custom_call.1} parent=1 // pred_check_branch
      %31 = sbr.rel (0) target = $region13
    $region12: #{tpu_custom_call.1} parent=1 // pred_region
      %32 = dma.done [#allocation3], 128
    $region13: #{tpu_custom_call.1} parent=1 // pred_fallthru
      _
    // Predicated region
    $region14: #{tpu_custom_call.1} parent=1 // pred_check
      _
    $region15: #{tpu_custom_call.1} parent=1 // pred_check_branch
      %34 = sbr.rel (0) target = $region17
    $region16: #{tpu_custom_call.1} parent=1 // pred_region
      %35 = dma.done [#allocation6], 128
    $region17: #{tpu_custom_call.1} parent=1 // pred_fallthru
      _
    %v36 = vld [vmem:[#allocation2] sm:$0xff]
    %v37 = vld [vmem:[#allocation5] sm:$0xff]
    %v38 = vsub.f32 %v36, %v37
    %v39 = vmul.f32 %v38, %v38
    %v40 = vrot.slane %v39, 4
    %v41 = vadd.f32 %v39, %v40
    %v42 = vrot.slane %v41, 2
    %v43 = vadd.f32 %v41, %v42
    %v44 = vrot.slane %v43, 1
    %v45 = vadd.f32 %v43, %v44
    %v46 = vmax.f32 %v45, 1e-30
    %v47 = vlog2.pop %v46
    %v48 = vmul.f32 %v47, 0.6931472
    %v49 = vmul.f32 %v48, 0.33333334
    %v50 = vmul.f32 %v49, 1.442695
    %v51 = vpow.pop %v50
    %vm52 = vcmp.gt.f32.partialorder %v45, 0.0
    %v53 = vsel %vm52, %v51, 0.0
    %v54 = vsub.f32 1.0, %v53
    %v55 = vlog2.pop %v54
    %v56 = vmul.f32 %v55, 0.6931472
    %v57 = vmul.f32 %v56, -0.4342945
    %vm58 = vcmask 1040384
    %v59 = vsel %vm58, %v57, 0.0
    %60 = vadd.xlane.f32.xlu0 %v59
    %v61 = vpop.xlane.xlu0 %60
    %v62 = vrot.slane %v61, 4
    %v63 = vadd.f32 %v61, %v62
    %v64 = vrot.slane %v63, 2
    %v65 = vadd.f32 %v63, %v64
    %v66 = vrot.slane %v65, 1
    %v67 = vadd.f32 %v65, %v66
    %s68 = vtos %v67
    %s69 = scalar_lea.smem [#allocation7], 0
    %70 = sst [smem:[%s69]] %s68
    // Predicated region
    $region18: #{tpu_custom_call.1} parent=1 // pred_check
      _
    $region19: #{tpu_custom_call.1} parent=1 // pred_check_branch
      %72 = sbr.rel (0) target = $region21
    $region20: #{tpu_custom_call.1} parent=1 // pred_region
      %s74 = ssub.s32 16, 16
      %75 = vsyncadd [#allocation4], %s74
      %78 = dma.smem_to_hbm [#allocation7], 16, %s2, [#allocation4]
    $region21: #{tpu_custom_call.1} parent=1 // pred_fallthru
      _
    // Predicated region
    $region22: #{tpu_custom_call.1} parent=1 // pred_check
      _
    $region23: #{tpu_custom_call.1} parent=1 // pred_check_branch
      %80 = sbr.rel (0) target = $region25
    $region24: #{tpu_custom_call.1} parent=1 // pred_region
      %81 = dma.done [#allocation4], 16
    $region25: #{tpu_custom_call.1} parent=1 // pred_fallthru
      _
    %82 = sfence
    %83 = vsyncpa [#allocation3], 1
    %84 = vsyncpa [#allocation6], 1
    %85 = vsyncpa [#allocation4], 1

</llo_original>
